<compile_context>
chip_gen: v5e
topology: v5e:2x2
jax: 0.10.0
libtpu: 0.0.40
codegen_flags: <defaults>
</compile_context>

<pallas_src>
import numpy as np
import jax
import jax.numpy as jnp
from jax.experimental import pallas as pl
from jax.experimental.pallas import tpu as pltpu


# ----------------------------------------------------------------------------
# Host-side constant setup: grid-aware position encoding, matching
# F.interpolate(mode='bilinear', align_corners=False, antialias=False).
# Pure shape-dependent constant -> precomputed on host, folded into the bias.
# ----------------------------------------------------------------------------
def _bilinear_resize(img, out_h, out_w):
    """img: numpy [C, H, W] -> [C, out_h, out_w]."""
    _, H, W = img.shape

    def coords(out_size, in_size):
        scale = in_size / out_size
        src = (np.arange(out_size, dtype=np.float64) + 0.5) * scale - 0.5
        src = np.maximum(src, 0.0)
        i0 = np.clip(np.floor(src).astype(np.int64), 0, in_size - 1)
        i1 = np.clip(i0 + 1, 0, in_size - 1)
        w1 = np.clip(src - i0, 0.0, 1.0)
        return i0, i1, w1

    y0, y1, wy = coords(out_h, H)
    x0, x1, wx = coords(out_w, W)
    wy = wy[None, :, None]
    wx = wx[None, None, :]
    top = img[:, y0][:, :, x0] * (1.0 - wx) + img[:, y0][:, :, x1] * wx
    bot = img[:, y1][:, :, x0] * (1.0 - wx) + img[:, y1][:, :, x1] * wx
    return top * (1.0 - wy) + bot * wy


def make_position_encoding(height, width, grid_size):
    """Returns [2, H, W] float32 encoding (y, x channels)."""
    y = np.linspace(-1.0, 1.0, height, dtype=np.float64)
    x = np.linspace(-1.0, 1.0, width, dtype=np.float64)
    y_grid = np.broadcast_to(y[:, None], (height, width))
    x_grid = np.broadcast_to(x[None, :], (height, width))
    grid = np.stack([y_grid, x_grid], axis=0)               # [2, H, W]
    grid = _bilinear_resize(grid, grid_size, grid_size)     # [2, g, g]
    grid = _bilinear_resize(grid, height, width)            # [2, H, W]
    return grid.astype(np.float32)


# ----------------------------------------------------------------------------
# Pallas kernels. grid = (B, num_query_tiles); every grid point independent.
#   x_ref    : (1, C, TQ)   residual tile (f32), lane-dense on TQ
#   q_ref    : (1, Cq, TQ)  query tile (compute dtype)
#   k_ref    : (1, Cq, N)   all keys for this batch element
#   v_ref    : (1, C,  N)   all values for this batch element
#   gamma_ref: (1, 1)       SMEM scalar
#   out_ref  : (1, C, TQ)   f32
#   attn_ref : (1, TQ, N)   attention rows (only in the with-attn variant)
# ----------------------------------------------------------------------------
def _attn_kernel_with_attn(x_ref, q_ref, k_ref, v_ref, gamma_ref,
                           out_ref, attn_ref):
    cdt = q_ref.dtype                                     # MXU operand dtype
    q = q_ref[0]                                          # [Cq, TQ]
    k = k_ref[0]                                          # [Cq, N]
    v = v_ref[0]                                          # [C,  N]

    # energy[t, n] = sum_c q[c, t] * k[c, n]   (no explicit transpose)
    energy = jax.lax.dot_general(q, k, (((0,), (0,)), ((), ())),
                                 preferred_element_type=jnp.float32)   # [TQ, N]
    e_max = jnp.max(energy, axis=-1, keepdims=True)                    # [TQ, 1]
    p = jnp.exp(energy - e_max)                                        # [TQ, N]
    denom = jnp.sum(p, axis=-1, keepdims=True)                         # [TQ, 1]
    # Exact reciprocal: this normalized matrix is returned to HBM, so keep it
    # tight (addresses the approx-reciprocal tolerance concern).
    attn = p * pl.reciprocal(denom, approx=False)                      # [TQ, N]

    # o[c, t] = sum_n v[c, n] * attn[t, n]
    o = jax.lax.dot_general(v, attn.astype(cdt), (((1,), (1,)), ((), ())),
                            preferred_element_type=jnp.float32)        # [C, TQ]

    g = gamma_ref[0, 0]
    out_ref[0] = (g * o + x_ref[0]).astype(out_ref.dtype)
    attn_ref[0] = attn.astype(attn_ref.dtype)


def _attn_kernel_out_only(x_ref, q_ref, k_ref, v_ref, gamma_ref, out_ref):
    # Keys on the sublane axis: softmax stats come out as [1, TQ] rows, so the
    # normalization can be deferred to the [C, TQ] AV result (N/C x fewer
    # elements) with a natural trailing-dim broadcast; the [TQ, N] normalize
    # multiply, cast and HBM store are skipped entirely.
    cdt = q_ref.dtype
    q = q_ref[0]                                          # [Cq, TQ]
    k = k_ref[0]                                          # [Cq, N]
    v = v_ref[0]                                          # [C,  N]

    # energy_t[n, t] = sum_c k[c, n] * q[c, t]
    energy_t = jax.lax.dot_general(k, q, (((0,), (0,)), ((), ())),
                                   preferred_element_type=jnp.float32)  # [N, TQ]
    e_max = jnp.max(energy_t, axis=0, keepdims=True)                    # [1, TQ]
    p_t = jnp.exp(energy_t - e_max)                                     # [N, TQ]
    denom = jnp.sum(p_t, axis=0, keepdims=True)                         # [1, TQ]

    # o[c, t] = sum_n v[c, n] * p_t[n, t]   (unnormalized)
    o = jax.lax.dot_general(v, p_t.astype(cdt), (((1,), (0,)), ((), ())),
                            preferred_element_type=jnp.float32)         # [C, TQ]
    o = o * pl.reciprocal(denom, approx=True)        # deferred softmax norm (EUP)

    g = gamma_ref[0, 0]
    out_ref[0] = (g * o + x_ref[0]).astype(out_ref.dtype)


# ----------------------------------------------------------------------------
# Generation-aware tiling helpers.
# ----------------------------------------------------------------------------
def _vmem_capacity_bytes(default=64 * 1024 * 1024):
    try:
        return int(pltpu.get_tpu_info().vmem_capacity_bytes)
    except Exception:   # interpret mode / older runtimes: assume the smallest (v7x)
        return default


def _pick_query_tile(N, C, Cq, *, attn_bytes, cdt_bytes, budget_bytes, tq_cap):
    """Largest multiple-of-128 divisor of N (<= tq_cap) whose working set fits."""
    fixed = 2 * (Cq + C) * N * cdt_bytes                  # K, V double buffers

    def per_tile(t):
        return (2 * t * N * attn_bytes                    # attn output tile
                + 2 * C * t * 4                           # x residual tile (f32)
                + 2 * C * t * 4                           # out tile (f32)
                + 2 * Cq * t * cdt_bytes)                 # q tile

    cands = [t for t in range(128, min(N, tq_cap) + 1, 128) if N % t == 0]
    if not cands:
        # TODO(synk): pad N (query axis) to a multiple of 128 instead of
        # falling back to a single full-width tile for ragged N.
        cands = [N]
    tq = cands[0]
    for t in sorted(cands, reverse=True):
        if fixed + per_tile(t) <= budget_bytes:
            tq = t
            break
    return tq


# ----------------------------------------------------------------------------
# Wrapper.
# ----------------------------------------------------------------------------
def grid_aware_attention(x_nchw, params, grid_size=4, *, q_tile_size=None,
                         compute_dtype=jnp.float32, attn_dtype=jnp.float32,
                         return_attention=True):
    """x_nchw: [B, C, H, W] float32 (channels_first).

    Returns (out [B,C,H,W], attention [B,N,N]) if return_attention, else out.
    """
    B, C, H, W = x_nchw.shape
    N = H * W
    Cq = C // 8
    wq, bq, wk, bk, wv, bv, gamma = params

    # Position encoding tiled across channels (see fidelity note at top).
    pos = make_position_encoding(H, W, grid_size)                      # [2, H, W]
    pos_cn = jnp.asarray(np.tile(pos, (C // 2, 1, 1)).reshape(C, N))   # [C, N]

    # Fused QKV projection, HOISTED out of the kernel (plain XLA GEMM; its
    # cost is O(C*(2Cq+C)*N) per batch, negligible vs the O(N^2) attention).
    # Position encoding folded into a per-position bias:
    #   W @ (x + pos) + b == W @ x + (W @ pos + b).
    w_qkv = jnp.concatenate([wq, wk, wv], axis=0)                      # [Ctot, C]
    b_qkv = jnp.concatenate([bq, bk, bv], axis=0)                      # [Ctot]
    bias_qkv = jnp.dot(w_qkv, pos_cn, precision='highest') + b_qkv[:, None]

    x_bcn = x_nchw.reshape(B, C, N)                   # channels-first: reshape only
    qkv = (jnp.einsum('oc,bcn->bon', w_qkv, x_bcn, precision='highest')
           + bias_qkv[None])                                           # [B, Ctot, N]
    q_all = qkv[:, :Cq, :].astype(compute_dtype)                       # [B, Cq, N]
    k_all = qkv[:, Cq:2 * Cq, :].astype(compute_dtype)                 # [B, Cq, N]
    v_all = qkv[:, 2 * Cq:, :].astype(compute_dtype)                   # [B, C,  N]

    # Generation-aware tiling: per-step VMEM is dominated by the attention
    # output tile (2*TQ*N*attn_bytes) plus the resident K/V double buffers.
    cdt_bytes = jnp.dtype(compute_dtype).itemsize
    attn_bytes = jnp.dtype(attn_dtype).itemsize if return_attention else 0
    vmem_cap = _vmem_capacity_bytes()                    # 128 MiB v5e/v6e, 64 MiB v7x
    vmem_limit = min(int(vmem_cap * 0.80), 100 * 1024 * 1024)
    if q_tile_size is None:
        q_tile_size = 512 if vmem_cap >= 96 * 1024 * 1024 else 256
    TQ = _pick_query_tile(N, C, Cq, attn_bytes=attn_bytes, cdt_bytes=cdt_bytes,
                          budget_bytes=vmem_limit - (4 << 20), tq_cap=q_tile_size)
    nq = N // TQ

    gamma_s = jnp.asarray(gamma, jnp.float32).reshape(1, 1)

    in_specs = [
        pl.BlockSpec((1, C, TQ), lambda b, q: (b, 0, q)),      # x residual tile
        pl.BlockSpec((1, Cq, TQ), lambda b, q: (b, 0, q)),     # Q tile
        pl.BlockSpec((1, Cq, N), lambda b, q: (b, 0, 0)),      # K (whole image)
        pl.BlockSpec((1, C, N), lambda b, q: (b, 0, 0)),       # V (whole image)
        pl.BlockSpec(memory_space=pltpu.MemorySpace.SMEM),     # gamma scalar
    ]
    out_spec_x = pl.BlockSpec((1, C, TQ), lambda b, q: (b, 0, q))

    cost = pl.CostEstimate(
        flops=int(2 * B * N * N * (Cq + C)),
        transcendentals=int(B * N * N),
        bytes_accessed=int(x_bcn.size * 4
                           + (q_all.size + k_all.size + v_all.size) * cdt_bytes
                           + B * C * N * 4 + B * N * N * attn_bytes))

    cparams = pltpu.CompilerParams(
        # Every (b, q) grid point is independent after the QKV hoist -> both
        # axes parallel (v7x megacore can split the query axis even at B=1).
        dimension_semantics=("parallel", "parallel"),
        vmem_limit_bytes=vmem_limit)

    if return_attention:
        out_bcn, attn = pl.pallas_call(
            _attn_kernel_with_attn,
            out_shape=(jax.ShapeDtypeStruct((B, C, N), jnp.float32),
                       jax.ShapeDtypeStruct((B, N, N), attn_dtype)),
            grid=(B, nq),
            in_specs=in_specs,
            out_specs=(out_spec_x,
                       pl.BlockSpec((1, TQ, N), lambda b, q: (b, q, 0))),
            compiler_params=cparams,
            cost_estimate=cost,
        )(x_bcn, q_all, k_all, v_all, gamma_s)
        return out_bcn.reshape(B, C, H, W), attn

    out_bcn = pl.pallas_call(
        _attn_kernel_out_only,
        out_shape=jax.ShapeDtypeStruct((B, C, N), jnp.float32),
        grid=(B, nq),
        in_specs=in_specs,
        out_specs=out_spec_x,
        compiler_params=cparams,
        cost_estimate=cost,
    )(x_bcn, q_all, k_all, v_all, gamma_s)
    return out_bcn.reshape(B, C, H, W)


# ----------------------------------------------------------------------------
# Pure-JAX reference (mirrors the PyTorch math) for verification.
# ----------------------------------------------------------------------------
def reference_forward(x_nchw, params, grid_size=4):
    B, C, H, W = x_nchw.shape
    N = H * W
    wq, bq, wk, bk, wv, bv, gamma = params
    pos = make_position_encoding(H, W, grid_size)
    pos_c = jnp.asarray(np.tile(pos, (C // 2, 1, 1)))[None]            # [1, C, H, W]
    xp = x_nchw + pos_c

    def conv1x1(x, w, b):
        return (jnp.einsum('bchw,oc->bohw', x, w, precision='highest')
                + b[None, :, None, None])

    q = conv1x1(xp, wq, bq)
    k = conv1x1(xp, wk, bk)
    v = conv1x1(xp, wv, bv)
    pq = q.reshape(B, -1, N).transpose(0, 2, 1)
    pk = k.reshape(B, -1, N).transpose(0, 2, 1)
    pv = v.reshape(B, -1, N).transpose(0, 2, 1)
    energy = jnp.einsum('bnc,bmc->bnm', pq, pk, precision='highest')
    attn = jax.nn.softmax(energy, axis=-1)
    out = jnp.einsum('bnm,bmc->bnc', attn, pv, precision='highest')
    out = out.transpose(0, 2, 1).reshape(B, C, H, W)
    return gamma * out + x_nchw, attn


if __name__ == "__main__":
    B, C, H, W = 2, 16, 16, 16        # input_dims=16 -> query/key channels = 2
    Cq = C // 8

    key = jax.random.PRNGKey(0)
    kx, k1, k2, k3, k4, k5, k6 = jax.random.split(key, 7)
    x = jax.random.normal(kx, (B, C, H, W), jnp.float32)

    params = (
        jax.random.normal(k1, (Cq, C), jnp.float32) * 0.1,   # query_conv weight [out,in]
        jax.random.normal(k2, (Cq,), jnp.float32) * 0.1,     # query_conv bias
        jax.random.normal(k3, (Cq, C), jnp.float32) * 0.1,   # key_conv weight
        jax.random.normal(k4, (Cq,), jnp.float32) * 0.1,     # key_conv bias
        jax.random.normal(k5, (C, C), jnp.float32) * 0.1,    # value_conv weight
        jax.random.normal(k6, (C,), jnp.float32) * 0.1,      # value_conv bias
        jnp.full((1,), 0.7, jnp.float32),                    # non-zero gamma to exercise residual gate
    )

    ref_out, ref_attn = reference_forward(x, params, grid_size=4)

    # f32 path with attention output; N=256, TQ=128 -> 2 query tiles per image.
    out, attn = grid_aware_attention(x, params, grid_size=4, q_tile_size=128)
    out, attn = jax.block_until_ready((out, attn))
    assert out.shape == (B, C, H, W) and attn.shape == (B, H * W, H * W)
    assert jnp.allclose(out, ref_out, atol=1e-3, rtol=1e-3)
    assert jnp.allclose(attn, ref_attn, atol=1e-4, rtol=1e-2)

    # out-only fast path: no [B,N,N] HBM writeback, deferred normalization.
    out_fast = grid_aware_attention(x, params, grid_size=4, q_tile_size=128,
                                    return_attention=False)
    out_fast = jax.block_until_ready(out_fast)
    assert out_fast.shape == (B, C, H, W)
    assert jnp.allclose(out_fast, ref_out, atol=1e-3, rtol=1e-3)

    # bf16 MXU operands + bf16 attention output (v6e/v7x fast path), with
    # correspondingly looser tolerances.
    out_bf, attn_bf = grid_aware_attention(
        x, params, grid_size=4, q_tile_size=128,
        compute_dtype=jnp.bfloat16, attn_dtype=jnp.bfloat16)
    out_bf, attn_bf = jax.block_until_ready((out_bf, attn_bf))
    assert jnp.allclose(out_bf, ref_out, atol=5e-2, rtol=5e-2)
    assert jnp.allclose(attn_bf.astype(jnp.float32), ref_attn, atol=5e-3, rtol=5e-2)

    print("KERNEL_OK")
</pallas_src>

<mosaic_0001>
module attributes {stable_mosaic.version = 11 : i64} {
  func.func @_attn_kernel_with_attn(%arg0: i32, %arg1: i32, %arg2: memref<1x16x128xf32, #tpu.memory_space<vmem>>, %arg3: memref<1x2x128xf32, #tpu.memory_space<vmem>>, %arg4: memref<1x2x256xf32, #tpu.memory_space<vmem>>, %arg5: memref<1x16x256xf32, #tpu.memory_space<vmem>>, %arg6: memref<1x1xf32, #tpu.memory_space<smem>>, %arg7: memref<1x16x128xf32, #tpu.memory_space<vmem>>, %arg8: memref<1x128x256xf32, #tpu.memory_space<vmem>>) attributes {dimension_semantics = [#tpu.dimension_semantics<parallel>, #tpu.dimension_semantics<parallel>], iteration_bounds = array<i64: 2, 2>, scalar_prefetch = 0 : i64, scratch_operands = 0 : i64, tpu.core_type = #tpu.core_type<tc>, window_params = [{transform_indices = @transform_0, window_bounds = array<i64: 1, 16, 128>}, {transform_indices = @transform_1, window_bounds = array<i64: 1, 2, 128>}, {transform_indices = @transform_2, window_bounds = array<i64: 1, 2, 256>}, {transform_indices = @transform_3, window_bounds = array<i64: 1, 16, 256>}, {transform_indices = @transform_4, window_bounds = array<i64: 1, 1>}, {transform_indices = @transform_5, window_bounds = array<i64: 1, 16, 128>}, {transform_indices = @transform_6, window_bounds = array<i64: 1, 128, 256>}]} {
    %c0 = arith.constant 0 : index
    %c0_0 = arith.constant 0 : index
    %c0_1 = arith.constant 0 : index
    %0 = vector.load %arg3[%c0, %c0_0, %c0_1] : memref<1x2x128xf32, #tpu.memory_space<vmem>>, vector<1x2x128xf32>
    %1 = vector.shape_cast %0 : vector<1x2x128xf32> to vector<2x128xf32>
    %c0_2 = arith.constant 0 : index
    %c0_3 = arith.constant 0 : index
    %c0_4 = arith.constant 0 : index
    %2 = vector.load %arg4[%c0_2, %c0_3, %c0_4] : memref<1x2x256xf32, #tpu.memory_space<vmem>>, vector<1x2x256xf32>
    %3 = vector.shape_cast %2 : vector<1x2x256xf32> to vector<2x256xf32>
    %c0_5 = arith.constant 0 : index
    %c0_6 = arith.constant 0 : index
    %c0_7 = arith.constant 0 : index
    %4 = vector.load %arg5[%c0_5, %c0_6, %c0_7] : memref<1x16x256xf32, #tpu.memory_space<vmem>>, vector<1x16x256xf32>
    %5 = vector.shape_cast %4 : vector<1x16x256xf32> to vector<16x256xf32>
    %cst = arith.constant dense<0.000000e+00> : vector<128x256xf32>
    %6 = tpu.matmul %1, %3, %cst {dimension_numbers = #tpu.dot_dimension_numbers<[0], [0], [1], [1], [0, 1, 1, 1], [], []>} : vector<2x128xf32>, vector<2x256xf32>, vector<128x256xf32> -> vector<128x256xf32>
    %cst_8 = arith.constant dense<0xFF800000> : vector<128xf32>
    %7 = vector.multi_reduction <maximumf>, %6, %cst_8 [1] : vector<128x256xf32> to vector<128xf32>
    %8 = vector.shape_cast %7 : vector<128xf32> to vector<128x1xf32>
    %9 = vector.broadcast %8 : vector<128x1xf32> to vector<128x256xf32>
    %10 = arith.subf %6, %9 : vector<128x256xf32>
    %11 = math.exp %10 : vector<128x256xf32>
    %cst_9 = arith.constant dense<0.000000e+00> : vector<128xf32>
    %12 = vector.multi_reduction <add>, %11, %cst_9 [1] : vector<128x256xf32> to vector<128xf32>
    %13 = vector.shape_cast %12 : vector<128xf32> to vector<128x1xf32>
    %14 = tpu.reciprocal %13 : vector<128x1xf32> -> vector<128x1xf32>
    %15 = vector.broadcast %14 : vector<128x1xf32> to vector<128x256xf32>
    %16 = arith.mulf %11, %15 : vector<128x256xf32>
    %cst_10 = arith.constant dense<0.000000e+00> : vector<16x128xf32>
    %17 = tpu.matmul %5, %16, %cst_10 {dimension_numbers = #tpu.dot_dimension_numbers<[1], [1], [0], [0], [0, 0, 1, 0], [], []>} : vector<16x256xf32>, vector<128x256xf32>, vector<16x128xf32> -> vector<16x128xf32>
    %c0_11 = arith.constant 0 : index
    %c0_12 = arith.constant 0 : index
    %18 = memref.load %arg6[%c0_11, %c0_12] : memref<1x1xf32, #tpu.memory_space<smem>>
    %19 = vector.broadcast %18 : f32 to vector<16x128xf32>
    %20 = arith.mulf %19, %17 : vector<16x128xf32>
    %c0_13 = arith.constant 0 : index
    %c0_14 = arith.constant 0 : index
    %c0_15 = arith.constant 0 : index
    %21 = vector.load %arg2[%c0_13, %c0_14, %c0_15] : memref<1x16x128xf32, #tpu.memory_space<vmem>>, vector<1x16x128xf32>
    %22 = vector.shape_cast %21 : vector<1x16x128xf32> to vector<16x128xf32>
    %23 = arith.addf %20, %22 : vector<16x128xf32>
    %c0_16 = arith.constant 0 : index
    %c0_17 = arith.constant 0 : index
    %c0_18 = arith.constant 0 : index
    %24 = vector.load %arg7[%c0_16, %c0_17, %c0_18] : memref<1x16x128xf32, #tpu.memory_space<vmem>>, vector<1x16x128xf32>
    %25 = vector.shape_cast %24 : vector<1x16x128xf32> to vector<16x128xf32>
    %26 = vector.shape_cast %23 : vector<16x128xf32> to vector<1x16x128xf32>
    tpu.vector_store %arg7[%c0_16, %c0_17, %c0_18], %26 {strides = array<i32>} : memref<1x16x128xf32, #tpu.memory_space<vmem>>, vector<1x16x128xf32>,
    %c0_19 = arith.constant 0 : index
    %c0_20 = arith.constant 0 : index
    %c0_21 = arith.constant 0 : index
    %27 = vector.load %arg8[%c0_19, %c0_20, %c0_21] : memref<1x128x256xf32, #tpu.memory_space<vmem>>, vector<1x128x256xf32>
    %28 = vector.shape_cast %27 : vector<1x128x256xf32> to vector<128x256xf32>
    %29 = vector.shape_cast %16 : vector<128x256xf32> to vector<1x128x256xf32>
    tpu.vector_store %arg8[%c0_19, %c0_20, %c0_21], %29 {strides = array<i32>} : memref<1x128x256xf32, #tpu.memory_space<vmem>>, vector<1x128x256xf32>,
    return
  }
  func.func @transform_0(%arg0: i32, %arg1: i32) -> (i32, i32, i32) {
    %c0_i32 = arith.constant 0 : i32
    %c0_i32_0 = arith.constant 0 : i32
    return %arg0, %c0_i32, %arg1 : i32, i32, i32
  }
  func.func @transform_1(%arg0: i32, %arg1: i32) -> (i32, i32, i32) {
    %c0_i32 = arith.constant 0 : i32
    %c0_i32_0 = arith.constant 0 : i32
    return %arg0, %c0_i32, %arg1 : i32, i32, i32
  }
  func.func @transform_2(%arg0: i32, %arg1: i32) -> (i32, i32, i32) {
    %c0_i32 = arith.constant 0 : i32
    %c0_i32_0 = arith.constant 0 : i32
    %c0_i32_1 = arith.constant 0 : i32
    return %arg0, %c0_i32, %c0_i32_0 : i32, i32, i32
  }
  func.func @transform_3(%arg0: i32, %arg1: i32) -> (i32, i32, i32) {
    %c0_i32 = arith.constant 0 : i32
    %c0_i32_0 = arith.constant 0 : i32
    %c0_i32_1 = arith.constant 0 : i32
    return %arg0, %c0_i32, %c0_i32_0 : i32, i32, i32
  }
  func.func @transform_4(%arg0: i32, %arg1: i32) -> (i32, i32) {
    %c0_i32 = arith.constant 0 : i32
    %c0_i32_0 = arith.constant 0 : i32
    %c0_i32_1 = arith.constant 0 : i32
    return %c0_i32, %c0_i32_0 : i32, i32
  }
  func.func @transform_5(%arg0: i32, %arg1: i32) -> (i32, i32, i32) {
    %c0_i32 = arith.constant 0 : i32
    %c0_i32_0 = arith.constant 0 : i32
    return %arg0, %c0_i32, %arg1 : i32, i32, i32
  }
  func.func @transform_6(%arg0: i32, %arg1: i32) -> (i32, i32, i32) {
    %c0_i32 = arith.constant 0 : i32
    %c0_i32_0 = arith.constant 0 : i32
    return %arg0, %arg1, %c0_i32 : i32, i32, i32
  }
}

</mosaic_0001>

<llo_original>
// kernel: tpu_custom_call.1
$region0: #{tpu_custom_call.1}
  #allocation0 [shape = 'u32[]', space=smem, size = 0x4, offset = 0x4, fixed_abs, tag = 'smem constant byte address 0x4 - core index']
  #allocation1 [shape = 'u32[72,128]{1,0:T(1,128)}', space=vmem, size = 0x9000, scoped, tag = 'internal scratch']
  #allocation2 [shape = 'f32[1,1]{1,0:T(1,128)S(6)}', space=smem, size = 0x200, scoped, tag = 'scoped memory for tpu_custom_call.1']
  %s0 = inlined_call_operand.hbm [shape: f32[2,16,256], index: 0, kind: input, shape index: {}]
  %s1 = inlined_call_operand.hbm [shape: f32[2,2,256], index: 1, kind: input, shape index: {}]
  %s2 = inlined_call_operand.hbm [shape: f32[2,2,256], index: 2, kind: input, shape index: {}]
  %s3 = inlined_call_operand.hbm [shape: f32[2,16,256], index: 3, kind: input, shape index: {}]
  %s4 = inlined_call_operand.<no memory space> [shape: f32[1,1], index: 4, kind: input, shape index: {}]
  %s5 = inlined_call_operand.hbm [shape: f32[2,16,256], index: 5, kind: output, shape index: {0}]
  %s6 = inlined_call_operand.hbm [shape: f32[2,256,256], index: 6, kind: output, shape index: {1}]
  %7 = xla_tuple %s5, %s6
  %s8 = sld [smem:[#allocation0]]
  $region77: #{tpu_custom_call.1} parent=0
    _
  %s10 = ssub.s32 1, %s8
  %s11 = scalar_select 0, %s10, %s8
  %12 = sst [smem:[#allocation2]] %s4
  $region1: #{tpu_custom_call.1} parent=0
    #allocation3 [shape = 'u8[16384]{0}', space=vmem, size = 0x4000, scoped, tag = 'input window, operand 0']
    #allocation4 [shape = 's32[2]{0}', space=sflag, size = 0x8, scoped, tag = 'scoped memory for tpu_custom_call.1']
    #allocation5 [shape = 's32[2]{0}', space=sflag, size = 0x8, scoped, tag = 'scoped memory for tpu_custom_call.1']
    #allocation6 [shape = 'u8[2048]{0}', space=vmem, size = 0x800, scoped, tag = 'input window, operand 1']
    #allocation7 [shape = 's32[2]{0}', space=sflag, size = 0x8, scoped, tag = 'scoped memory for tpu_custom_call.1']
    #allocation8 [shape = 'u8[4096]{0}', space=vmem, size = 0x1000, scoped, tag = 'input window, operand 2']
    #allocation9 [shape = 'u8[32768]{0}', space=vmem, size = 0x8000, scoped, tag = 'input window, operand 3']
    #allocation10 [shape = 's32[2]{0}', space=sflag, size = 0x8, scoped, tag = 'scoped memory for tpu_custom_call.1']
    #allocation11 [shape = 'u8[16384]{0}', space=vmem, size = 0x4000, scoped, tag = 'output window, operand 0']
    #allocation12 [shape = 'u8[262144]{0}', space=vmem, size = 0x40000, scoped, tag = 'output window, operand 1']
    #allocation13 [shape = 's32[2]{0}', space=sflag, size = 0x8, scoped, tag = 'scoped memory for tpu_custom_call.1']
    %13 = vsyncpa [#allocation4], 0
    %s14 = scalar_lea.sflag [#allocation4], 1
    %15 = vsyncpa %s14, 0
    %16 = vsyncpa [#allocation7], 0
    %s17 = scalar_lea.sflag [#allocation7], 1
    %18 = vsyncpa %s17, 0
    %19 = vsyncpa [#allocation10], 0
    %s20 = scalar_lea.sflag [#allocation10], 1
    %21 = vsyncpa %s20, 0
    %22 = vsyncpa [#allocation5], 0
    %s23 = scalar_lea.sflag [#allocation5], 1
    %24 = vsyncpa %s23, 0
    %25 = vsyncpa [#allocation13], 0
    %s26 = scalar_lea.sflag [#allocation13], 1
    %27 = vsyncpa %s26, 0
    loop: start=0, step=1, limit=6
    $region2: #{tpu_custom_call.1} parent=1 // loop_pre_header
      _
    $region3: #{tpu_custom_call.1} parent=1 // loop_header
      %s29 = sphi 0, %s33
      %p30 = scmp.ge.s32.totalorder %s29, 6
      %s36 = sphi 0, %s48
      %s37 = sphi 0, %s44
      %s38 = sphi 0, %s36
      %s39 = sphi 0, %s37
      %s40 = sphi 0, %s38
      %s41 = sphi 0, %s39
      %s53 = sphi 0, %s55
      %s56 = sphi 0, %s53
      %s57 = sphi 0, %s56
      %s73 = sphi 0, %s57
      %s81 = sphi 0, %s83
      %s84 = sphi 0, %s81
      %s85 = sphi 0, %s84
      %s101 = sphi 0, %s85
      %s107 = sphi 0, %s109
      %s110 = sphi 0, %s107
      %s111 = sphi 0, %s110
      %s127 = sphi 0, %s111
      %s133 = sphi 0, %s135
      %s136 = sphi 0, %s133
      %s137 = sphi 0, %s136
      %s153 = sphi 0, %s137
      %s157 = sphi 0, %s157
      %s159 = sphi 0, %s157
      %s160 = sphi 0, %s159
      %s174 = sphi 0, %s160
      %s182 = sphi 0, %s184
      %s185 = sphi 0, %s182
      %s186 = sphi 0, %s185
      %s202 = sphi 0, %s186
      %s210 = sphi 0, %s212
      %s213 = sphi 0, %s210
      %s214 = sphi 0, %s213
      %s230 = sphi 0, %s214
    $region4: #{tpu_custom_call.1} parent=1 // loop_header_branch
      %32 = sbr.rel (%p30) target = $region8
    $region5: #{tpu_custom_call.1} parent=1 // loop_body
      %s34 = ssub.s32 %s29, 1
      %s35 = ssub.s32 %s29, 2
      %s42 = sadd.s32 1, %s37
      %p43 = scmp.ge.s32.totalorder %s42, 2
      %s44 = scalar_select %p43, 0, %s42
      %s45 = sadd.s32 1, %s36
      %s46 = scalar_select %p43, %s45, %s36
      %p47 = scmp.ge.s32.totalorder %s46, 2
      %s48 = scalar_select %p47, 0, %s46
      %s49 = ssub.s32 %s36, %s48
      %s50 = ssub.s32 %s37, %s44
      %s51 = sor.u32 %s49, %s50
      %p52 = scmp.eq.s32.totalorder %s51, 0
      %s54 = sadd.s32 %s53, 1
      %s55 = scalar_select %p52, %s53, %s54
      %p58 = pneg %p52
      %p59 = scmp.eq.s32.totalorder %s29, 3
      %p60 = por %p58, %p59
      %p61 = scmp.ne.s32.totalorder %s53, %s56
      %p62 = scmp.eq.s32.totalorder %s29, 0
      %p63 = por %p61, %p62
      %p64 = scmp.ne.s32.totalorder %s53, %s56
      %p65 = scmp.eq.s32.totalorder %s34, 3
      %p66 = por %p64, %p65
      %p67 = scmp.ne.s32.totalorder %s56, %s57
      %p68 = scmp.eq.s32.totalorder %s34, 0
      %p69 = por %p67, %p68
      %p70 = scmp.ne.s32.totalorder %s56, %s57
      %p71 = scmp.eq.s32.totalorder %s35, 3
      %p72 = por %p70, %p71
      %p74 = scmp.ne.s32.totalorder %s57, %s73
      %p75 = scmp.eq.s32.totalorder %s35, 0
      %p76 = por %p74, %p75
      %s77 = ssub.s32 %s36, %s48
      %s78 = ssub.s32 %s37, %s44
      %s79 = sor.u32 %s77, %s78
      %p80 = scmp.eq.s32.totalorder %s79, 0
      %s82 = sadd.s32 %s81, 1
      %s83 = scalar_select %p80, %s81, %s82
      %p86 = pneg %p80
      %p87 = scmp.eq.s32.totalorder %s29, 3
      %p88 = por %p86, %p87
      %p89 = scmp.ne.s32.totalorder %s81, %s84
      %p90 = scmp.eq.s32.totalorder %s29, 0
      %p91 = por %p89, %p90
      %p92 = scmp.ne.s32.totalorder %s81, %s84
      %p93 = scmp.eq.s32.totalorder %s34, 3
      %p94 = por %p92, %p93
      %p95 = scmp.ne.s32.totalorder %s84, %s85
      %p96 = scmp.eq.s32.totalorder %s34, 0
      %p97 = por %p95, %p96
      %p98 = scmp.ne.s32.totalorder %s84, %s85
      %p99 = scmp.eq.s32.totalorder %s35, 3
      %p100 = por %p98, %p99
      %p102 = scmp.ne.s32.totalorder %s85, %s101
      %p103 = scmp.eq.s32.totalorder %s35, 0
      %p104 = por %p102, %p103
      %s105 = ssub.s32 %s36, %s48
      %p106 = scmp.eq.s32.totalorder %s105, 0
      %s108 = sadd.s32 %s107, 1
      %s109 = scalar_select %p106, %s107, %s108
      %p112 = pneg %p106
      %p113 = scmp.eq.s32.totalorder %s29, 3
      %p114 = por %p112, %p113
      %p115 = scmp.ne.s32.totalorder %s107, %s110
      %p116 = scmp.eq.s32.totalorder %s29, 0
      %p117 = por %p115, %p116
      %p118 = scmp.ne.s32.totalorder %s107, %s110
      %p119 = scmp.eq.s32.totalorder %s34, 3
      %p120 = por %p118, %p119
      %p121 = scmp.ne.s32.totalorder %s110, %s111
      %p122 = scmp.eq.s32.totalorder %s34, 0
      %p123 = por %p121, %p122
      %p124 = scmp.ne.s32.totalorder %s110, %s111
      %p125 = scmp.eq.s32.totalorder %s35, 3
      %p126 = por %p124, %p125
      %p128 = scmp.ne.s32.totalorder %s111, %s127
      %p129 = scmp.eq.s32.totalorder %s35, 0
      %p130 = por %p128, %p129
      %s131 = ssub.s32 %s36, %s48
      %p132 = scmp.eq.s32.totalorder %s131, 0
      %s134 = sadd.s32 %s133, 1
      %s135 = scalar_select %p132, %s133, %s134
      %p138 = pneg %p132
      %p139 = scmp.eq.s32.totalorder %s29, 3
      %p140 = por %p138, %p139
      %p141 = scmp.ne.s32.totalorder %s133, %s136
      %p142 = scmp.eq.s32.totalorder %s29, 0
      %p143 = por %p141, %p142
      %p144 = scmp.ne.s32.totalorder %s133, %s136
      %p145 = scmp.eq.s32.totalorder %s34, 3
      %p146 = por %p144, %p145
      %p147 = scmp.ne.s32.totalorder %s136, %s137
      %p148 = scmp.eq.s32.totalorder %s34, 0
      %p149 = por %p147, %p148
      %p150 = scmp.ne.s32.totalorder %s136, %s137
      %p151 = scmp.eq.s32.totalorder %s35, 3
      %p152 = por %p150, %p151
      %p154 = scmp.ne.s32.totalorder %s137, %s153
      %p155 = scmp.eq.s32.totalorder %s35, 0
      %p156 = por %p154, %p155
      %s158 = sadd.s32 %s157, 1
      %p161 = scmp.eq.s32.totalorder %s29, 3
      %p162 = scmp.ne.s32.totalorder %s157, %s159
      %p163 = scmp.eq.s32.totalorder %s29, 0
      %p164 = por %p162, %p163
      %p165 = scmp.ne.s32.totalorder %s157, %s159
      %p166 = scmp.eq.s32.totalorder %s34, 3
      %p167 = por %p165, %p166
      %p168 = scmp.ne.s32.totalorder %s159, %s160
      %p169 = scmp.eq.s32.totalorder %s34, 0
      %p170 = por %p168, %p169
      %p171 = scmp.ne.s32.totalorder %s159, %s160
      %p172 = scmp.eq.s32.totalorder %s35, 3
      %p173 = por %p171, %p172
      %p175 = scmp.ne.s32.totalorder %s160, %s174
      %p176 = scmp.eq.s32.totalorder %s35, 0
      %p177 = por %p175, %p176
      %s178 = ssub.s32 %s36, %s48
      %s179 = ssub.s32 %s37, %s44
      %s180 = sor.u32 %s178, %s179
      %p181 = scmp.eq.s32.totalorder %s180, 0
      %s183 = sadd.s32 %s182, 1
      %s184 = scalar_select %p181, %s182, %s183
      %p187 = pneg %p181
      %p188 = scmp.eq.s32.totalorder %s29, 3
      %p189 = por %p187, %p188
      %p190 = scmp.ne.s32.totalorder %s182, %s185
      %p191 = scmp.eq.s32.totalorder %s29, 0
      %p192 = por %p190, %p191
      %p193 = scmp.ne.s32.totalorder %s182, %s185
      %p194 = scmp.eq.s32.totalorder %s34, 3
      %p195 = por %p193, %p194
      %p196 = scmp.ne.s32.totalorder %s185, %s186
      %p197 = scmp.eq.s32.totalorder %s34, 0
      %p198 = por %p196, %p197
      %p199 = scmp.ne.s32.totalorder %s185, %s186
      %p200 = scmp.eq.s32.totalorder %s35, 3
      %p201 = por %p199, %p200
      %p203 = scmp.ne.s32.totalorder %s186, %s202
      %p204 = scmp.eq.s32.totalorder %s35, 0
      %p205 = por %p203, %p204
      %s206 = ssub.s32 %s36, %s48
      %s207 = ssub.s32 %s37, %s44
      %s208 = sor.u32 %s206, %s207
      %p209 = scmp.eq.s32.totalorder %s208, 0
      %s211 = sadd.s32 %s210, 1
      %s212 = scalar_select %p209, %s210, %s211
      %p215 = pneg %p209
      %p216 = scmp.eq.s32.totalorder %s29, 3
      %p217 = por %p215, %p216
      %p218 = scmp.ne.s32.totalorder %s210, %s213
      %p219 = scmp.eq.s32.totalorder %s29, 0
      %p220 = por %p218, %p219
      %p221 = scmp.ne.s32.totalorder %s210, %s213
      %p222 = scmp.eq.s32.totalorder %s34, 3
      %p223 = por %p221, %p222
      %p224 = scmp.ne.s32.totalorder %s213, %s214
      %p225 = scmp.eq.s32.totalorder %s34, 0
      %p226 = por %p224, %p225
      %p227 = scmp.ne.s32.totalorder %s213, %s214
      %p228 = scmp.eq.s32.totalorder %s35, 3
      %p229 = por %p227, %p228
      %p231 = scmp.ne.s32.totalorder %s214, %s230
      %p232 = scmp.eq.s32.totalorder %s35, 0
      %p233 = por %p231, %p232
      %p234 = scmp.le.s32.totalorder 1, %s29
      %p235 = scmp.lt.s32.totalorder %s29, 5
      %p236 = pnand %p234, %p235
      %p237 = pneg %p236
      // Predicated region
      $region9: #{tpu_custom_call.1} parent=5 // pred_check
        _
      $region10: #{tpu_custom_call.1} parent=5 // pred_check_branch
        %239 = sbr.rel (%p236) target = $region12
      $region11: #{tpu_custom_call.1} parent=5 // pred_region
        %s240 = ssub.s32 %s29, 1
        // Predicated region
        $region13: #{tpu_custom_call.1} parent=11 // pred_check
          %p241 = pneg %p170
        $region14: #{tpu_custom_call.1} parent=11 // pred_check_branch
          %243 = sbr.rel (%p241) target = $region16
        $region15: #{tpu_custom_call.1} parent=11 // pred_region
          _
        $region16: #{tpu_custom_call.1} parent=11 // pred_fallthru
          _
      $region12: #{tpu_custom_call.1} parent=5 // pred_fallthru
        _
      %p244 = scmp.lt.s32.totalorder %s29, 4
      // Predicated region
      $region17: #{tpu_custom_call.1} parent=5 // pred_check
        %p245 = pneg %p244
      $region18: #{tpu_custom_call.1} parent=5 // pred_check_branch
        %247 = sbr.rel (%p245) target = $region20
      $region19: #{tpu_custom_call.1} parent=5 // pred_region
        // Predicated region
        $region21: #{tpu_custom_call.1} parent=19 // pred_check
          %p248 = pneg %p63
        $region22: #{tpu_custom_call.1} parent=19 // pred_check_branch
          %250 = sbr.rel (%p248) target = $region24
        $region23: #{tpu_custom_call.1} parent=19 // pred_region
          %s251 = sand.u32 %s53, 1
          %s252 = scalar_lea.sflag [#allocation4], %s251
          %s253 = sand.u32 %s53, 1
          %s254 = smul.addr %s253, 16
          %s255 = scalar_lea.vmem [#allocation3], %s254
          %257 = vsyncadd %s252, 0
          %s258 = smul.addr %s36, 4
          %s259 = sadd.s32 %s37, %s258
          %s260 = smul.addr %s259, 8
          %s261 = scalar_lea.hbm %s0, %s260
          %s262 = sshll.u32 %s261, 4
          %s263 = int_to_ptr.hbm [resolvable:$true] %s262
          %s264 = sshll.u32 %s255, 4
          %s265 = int_to_ptr.vmem [resolvable:$true] %s264
          %270 = dma.hbm_to_vmem [thread:$0]  %s263, 256, %s265, %s252, 256, 128, 8
        $region24: #{tpu_custom_call.1} parent=19 // pred_fallthru
          _
        // Predicated region
        $region25: #{tpu_custom_call.1} parent=19 // pred_check
          %p271 = pneg %p91
        $region26: #{tpu_custom_call.1} parent=19 // pred_check_branch
          %273 = sbr.rel (%p271) target = $region28
        $region27: #{tpu_custom_call.1} parent=19 // pred_region
          %s274 = sand.u32 %s29, 1
          %s275 = scalar_lea.sflag [#allocation7], %s274
          %s276 = sand.u32 %s81, 1
          %s277 = smul.addr %s276, 2
          %s278 = scalar_lea.vmem [#allocation6], %s277
          %280 = vsyncadd %s275, 0
          %s281 = smul.addr %s36, 2
          %s282 = sadd.s32 %s37, %s281
          %s283 = smul.addr %s282, 2
          %s284 = scalar_lea.hbm %s1, %s283
          %s286 = sshll.u32 %s284, 4
          %s287 = int_to_ptr.hbm [resolvable:$true] %s286
          %s288 = sshll.u32 %s278, 4
          %s289 = int_to_ptr.vmem [resolvable:$true] %s288
          %291 = dma.hbm_to_vmem [thread:$0]  %s287, 32, %s289, %s275
        $region28: #{tpu_custom_call.1} parent=19 // pred_fallthru
          _
        // Predicated region
        $region29: #{tpu_custom_call.1} parent=19 // pred_check
          %p292 = pneg %p117
        $region30: #{tpu_custom_call.1} parent=19 // pred_check_branch
          %294 = sbr.rel (%p292) target = $region32
        $region31: #{tpu_custom_call.1} parent=19 // pred_region
          %s295 = sand.u32 %s29, 1
          %s296 = scalar_lea.sflag [#allocation7], %s295
          %s297 = sand.u32 %s107, 1
          %s298 = smul.addr %s297, 4
          %s299 = scalar_lea.vmem [#allocation8], %s298
          %301 = vsyncadd %s296, 0
          %s302 = smul.addr %s36, 2
          %s303 = smul.addr %s302, 2
          %s304 = scalar_lea.hbm %s2, %s303
          %s306 = sshll.u32 %s304, 4
          %s307 = int_to_ptr.hbm [resolvable:$true] %s306
          %s308 = sshll.u32 %s299, 4
          %s309 = int_to_ptr.vmem [resolvable:$true] %s308
          %311 = dma.hbm_to_vmem [thread:$0]  %s307, 64, %s309, %s296
        $region32: #{tpu_custom_call.1} parent=19 // pred_fallthru
          _
        // Predicated region
        $region33: #{tpu_custom_call.1} parent=19 // pred_check
          %p312 = pneg %p143
        $region34: #{tpu_custom_call.1} parent=19 // pred_check_branch
          %314 = sbr.rel (%p312) target = $region36
        $region35: #{tpu_custom_call.1} parent=19 // pred_region
          %s315 = sand.u32 %s133, 1
          %s316 = scalar_lea.sflag [#allocation10], %s315
          %s317 = sand.u32 %s133, 1
          %s318 = smul.addr %s317, 32
          %s319 = scalar_lea.vmem [#allocation9], %s318
          %321 = vsyncadd %s316, 0
          %s322 = smul.addr %s36, 4
          %s323 = smul.addr %s322, 8
          %s324 = scalar_lea.hbm %s3, %s323
          %s325 = sshll.u32 %s324, 4
          %s326 = int_to_ptr.hbm [resolvable:$true] %s325
          %s327 = sshll.u32 %s319, 4
          %s328 = int_to_ptr.vmem [resolvable:$true] %s327
          %333 = dma.hbm_to_vmem [thread:$0]  %s326, 512, %s328, %s316, 256, 256, 16
        $region36: #{tpu_custom_call.1} parent=19 // pred_fallthru
          _
      $region20: #{tpu_custom_call.1} parent=5 // pred_fallthru
        _
      %p334 = scmp.le.s32.totalorder 1, %s29
      %p335 = scmp.lt.s32.totalorder %s29, 5
      %p336 = pnand %p334, %p335
      %p337 = pneg %p336
      // Predicated region
      $region37: #{tpu_custom_call.1} parent=5 // pred_check
        _
      $region38: #{tpu_custom_call.1} parent=5 // pred_check_branch
        %339 = sbr.rel (%p336) target = $region40
      $region39: #{tpu_custom_call.1} parent=5 // pred_region
        %s340 = ssub.s32 %s29, 1
        %s341 = sand.u32 %s56, 1
        %s342 = scalar_lea.sflag [#allocation4], %s341
        %s343 = sand.u32 %s56, 1
        %s344 = smul.addr %s343, 16
        %s345 = scalar_lea.vmem [#allocation3], %s344
        // Predicated region
        $region41: #{tpu_custom_call.1} parent=39 // pred_check
          %p346 = pneg %p69
        $region42: #{tpu_custom_call.1} parent=39 // pred_check_branch
          %348 = sbr.rel (%p346) target = $region44
        $region43: #{tpu_custom_call.1} parent=39 // pred_region
          %350 = dma.done %s342, 256
        $region44: #{tpu_custom_call.1} parent=39 // pred_fallthru
          _
        %s351 = sand.u32 %s34, 1
        %s352 = scalar_lea.sflag [#allocation7], %s351
        %s353 = sand.u32 %s84, 1
        %s354 = smul.addr %s353, 2
        %s355 = scalar_lea.vmem [#allocation6], %s354
        // Predicated region
        $region45: #{tpu_custom_call.1} parent=39 // pred_check
          %p356 = pneg %p97
        $region46: #{tpu_custom_call.1} parent=39 // pred_check_branch
          %358 = sbr.rel (%p356) target = $region48
        $region47: #{tpu_custom_call.1} parent=39 // pred_region
          %360 = dma.done %s352, 32
        $region48: #{tpu_custom_call.1} parent=39 // pred_fallthru
          _
        %s361 = sand.u32 %s34, 1
        %s362 = scalar_lea.sflag [#allocation7], %s361
        %s363 = sand.u32 %s110, 1
        %s364 = smul.addr %s363, 4
        %s365 = scalar_lea.vmem [#allocation8], %s364
        // Predicated region
        $region49: #{tpu_custom_call.1} parent=39 // pred_check
          %p366 = pneg %p123
        $region50: #{tpu_custom_call.1} parent=39 // pred_check_branch
          %368 = sbr.rel (%p366) target = $region52
        $region51: #{tpu_custom_call.1} parent=39 // pred_region
          %370 = dma.done %s362, 64
        $region52: #{tpu_custom_call.1} parent=39 // pred_fallthru
          _
        %s371 = sand.u32 %s136, 1
        %s372 = scalar_lea.sflag [#allocation10], %s371
        %s373 = sand.u32 %s136, 1
        %s374 = smul.addr %s373, 32
        %s375 = scalar_lea.vmem [#allocation9], %s374
        // Predicated region
        $region53: #{tpu_custom_call.1} parent=39 // pred_check
          %p376 = pneg %p149
        $region54: #{tpu_custom_call.1} parent=39 // pred_check_branch
          %378 = sbr.rel (%p376) target = $region56
        $region55: #{tpu_custom_call.1} parent=39 // pred_region
          %380 = dma.done %s372, 512
        $region56: #{tpu_custom_call.1} parent=39 // pred_fallthru
          _
        %s381 = sand.u32 %s56, 1
        %s382 = scalar_lea.sflag [#allocation4], %s381
        %s383 = sand.u32 %s56, 1
        %s384 = smul.addr %s383, 16
        %s385 = scalar_lea.vmem [#allocation3], %s384
        %p386 = pneg %p69
        %p387 = pneg %p66
        %s388 = sand.u32 %s34, 1
        %s389 = scalar_lea.sflag [#allocation7], %s388
        %s390 = sand.u32 %s84, 1
        %s391 = smul.addr %s390, 2
        %s392 = scalar_lea.vmem [#allocation6], %s391
        %p393 = pneg %p97
        %p394 = pneg %p94
        %s395 = sand.u32 %s34, 1
        %s396 = scalar_lea.sflag [#allocation7], %s395
        %s397 = sand.u32 %s110, 1
        %s398 = smul.addr %s397, 4
        %s399 = scalar_lea.vmem [#allocation8], %s398
        %p400 = pneg %p123
        %p401 = pneg %p120
        %s402 = sand.u32 %s136, 1
        %s403 = scalar_lea.sflag [#allocation10], %s402
        %s404 = sand.u32 %s136, 1
        %s405 = smul.addr %s404, 32
        %s406 = scalar_lea.vmem [#allocation9], %s405
        %p407 = pneg %p149
        %p408 = pneg %p146
        %p409 = pneg %p170
        %p410 = pneg %p167
        %p411 = pneg %p198
        %p412 = pneg %p195
        %s413 = sand.u32 %s185, 1
        %s414 = scalar_lea.sflag [#allocation5], %s413
        %s415 = sand.u32 %s185, 1
        %s416 = smul.addr %s415, 16
        %s417 = scalar_lea.vmem [#allocation11], %s416
        %p418 = pneg %p226
        %p419 = pneg %p223
        %s420 = sand.u32 %s213, 1
        %s421 = scalar_lea.sflag [#allocation13], %s420
        %s422 = sand.u32 %s213, 1
        %s423 = smul.addr %s422, 256
        %s424 = scalar_lea.vmem [#allocation12], %s423
        %s425 = smul.u32 16, %s39
        %v426 = vld [vmem:[%s355] sm:$0x3]
        %v427 = vld [vmem:[%s365] sm:$0xf]
        %v428 = vld [vmem:[%s375] sm:$0xff]
        %v429 = vld [vmem:[%s375 + $0x8] sm:$0xff]
        %v430 = vld [vmem:[%s375 + $0x10] sm:$0xff]
        %v431 = vld [vmem:[%s375 + $0x18] sm:$0xff]
        %432 = vxpose.xlu0.b32.start [1/16] %v426, 128
        %433 = vxpose.xlu0.b32.cont [2/16] 0.0, 128
        %434 = vxpose.xlu0.b32.cont [3/16] 0.0, 128
        %435 = vxpose.xlu0.b32.cont [4/16] 0.0, 128
        %436 = vxpose.xlu0.b32.cont [5/16] 0.0, 128
        %437 = vxpose.xlu0.b32.cont [6/16] 0.0, 128
        %438 = vxpose.xlu0.b32.cont [7/16] 0.0, 128
        %439 = vxpose.xlu0.b32.cont [8/16] 0.0, 128
        %440 = vxpose.xlu0.b32.cont [9/16] 0.0, 128
        %441 = vxpose.xlu0.b32.cont [10/16] 0.0, 128
        %442 = vxpose.xlu0.b32.cont [11/16] 0.0, 128
        %443 = vxpose.xlu0.b32.cont [12/16] 0.0, 128
        %444 = vxpose.xlu0.b32.cont [13/16] 0.0, 128
        %445 = vxpose.xlu0.b32.cont [14/16] 0.0, 128
        %446 = vxpose.xlu0.b32.cont [15/16] 0.0, 128
        %447 = vxpose.xlu0.b32.end [16/16] 0.0, 128
        %v448 = vpop.trf.xlu0
        %v449 = vpop.trf.xlu0
        %v450 = vpop.trf.xlu0
        %v451 = vpop.trf.xlu0
        %v452 = vpop.trf.xlu0
        %v453 = vpop.trf.xlu0
        %v454 = vpop.trf.xlu0
        %v455 = vpop.trf.xlu0
        %v456 = vpop.trf.xlu0
        %v457 = vpop.trf.xlu0
        %v458 = vpop.trf.xlu0
        %v459 = vpop.trf.xlu0
        %v460 = vpop.trf.xlu0
        %v461 = vpop.trf.xlu0
        %v462 = vpop.trf.xlu0
        %v463 = vpop.trf.xlu0
        %465 = vst [vmem:[#allocation1] ss:$4 sm:$0xff] %v427
        %v466 = vld.sshfl [vmem:[#allocation1] sm:$0xff pattern:$0x73625140]
        %v467 = vld.sshfl [vmem:[#allocation1 + $0x8] sm:$0xff pattern:$0x73625140]
        %vm468 = vcmask 15360
        %v470 = vsel %vm468, %v448, 0
        %v473 = vsel %vm468, %v449, 0
        %v476 = vsel %vm468, %v450, 0
        %v479 = vsel %vm468, %v451, 0
        %v482 = vsel %vm468, %v452, 0
        %v485 = vsel %vm468, %v453, 0
        %v488 = vsel %vm468, %v454, 0
        %v491 = vsel %vm468, %v455, 0
        %v494 = vsel %vm468, %v456, 0
        %v497 = vsel %vm468, %v457, 0
        %v500 = vsel %vm468, %v458, 0
        %v503 = vsel %vm468, %v459, 0
        %v506 = vsel %vm468, %v460, 0
        %v509 = vsel %vm468, %v461, 0
        %v512 = vsel %vm468, %v462, 0
        %v515 = vsel %vm468, %v463, 0
        %vm517 = vcmask 1041408
        %v518 = vsel %vm517, %v466, 0
        %v520 = vsel %vm517, %v467, 0
        %522 = vmatpush.msra.mxu0 0.0
        %523 = vmatpush.msra.mxu0 0.0
        %524 = vmatpush.msra.mxu0 0.0
        %525 = vmatpush.msra.mxu0 0.0
        %526 = vmatpush.msra.mxu0 0.0
        %527 = vmatpush.msra.mxu0 0.0
        %528 = vmatpush.msra.mxu0 0.0
        %529 = vmatpush.msra.mxu0 0.0
        %530 = vmatpush.msra.mxu0 0.0
        %531 = vmatpush.msra.mxu0 0.0
        %532 = vmatpush.msra.mxu0 0.0
        %533 = vmatpush.msra.mxu0 0.0
        %534 = vmatpush.msra.mxu0 0.0
        %535 = vmatpush.msra.mxu0 0.0
        %536 = vmatpush.msra.mxu0 0.0
        %537 = vmatpush.msra.mxu0 %v518
        %538 = vmatmul.f32.gmra.mxu0 %v470
        %v539 = vpop.f32.mrf.mxu0
        %v540 = vadd.f32 0.0, %v539
        %541 = vmatmul.f32.gmra.mxu0 %v473
        %v542 = vpop.f32.mrf.mxu0
        %v543 = vadd.f32 0.0, %v542
        %544 = vmatmul.f32.gmra.mxu0 %v476
        %v545 = vpop.f32.mrf.mxu0
        %v546 = vadd.f32 0.0, %v545
        %547 = vmatmul.f32.gmra.mxu0 %v479
        %v548 = vpop.f32.mrf.mxu0
        %v549 = vadd.f32 0.0, %v548
        %550 = vmatmul.f32.gmra.mxu0 %v482
        %v551 = vpop.f32.mrf.mxu0
        %v552 = vadd.f32 0.0, %v551
        %553 = vmatmul.f32.gmra.mxu0 %v485
        %v554 = vpop.f32.mrf.mxu0
        %v555 = vadd.f32 0.0, %v554
        %556 = vmatmul.f32.gmra.mxu0 %v488
        %v557 = vpop.f32.mrf.mxu0
        %v558 = vadd.f32 0.0, %v557
        %559 = vmatmul.f32.gmra.mxu0 %v491
        %v560 = vpop.f32.mrf.mxu0
        %v561 = vadd.f32 0.0, %v560
        %562 = vmatmul.f32.gmra.mxu0 %v494
        %v563 = vpop.f32.mrf.mxu0
        %v564 = vadd.f32 0.0, %v563
        %565 = vmatmul.f32.gmra.mxu0 %v497
        %v566 = vpop.f32.mrf.mxu0
        %v567 = vadd.f32 0.0, %v566
        %568 = vmatmul.f32.gmra.mxu0 %v500
        %v569 = vpop.f32.mrf.mxu0
        %v570 = vadd.f32 0.0, %v569
        %571 = vmatmul.f32.gmra.mxu0 %v503
        %v572 = vpop.f32.mrf.mxu0
        %v573 = vadd.f32 0.0, %v572
        %574 = vmatmul.f32.gmra.mxu0 %v506
        %v575 = vpop.f32.mrf.mxu0
        %v576 = vadd.f32 0.0, %v575
        %577 = vmatmul.f32.gmra.mxu0 %v509
        %v578 = vpop.f32.mrf.mxu0
        %v579 = vadd.f32 0.0, %v578
        %580 = vmatmul.f32.gmra.mxu0 %v512
        %v581 = vpop.f32.mrf.mxu0
        %v582 = vadd.f32 0.0, %v581
        %583 = vmatmul.f32.gmra.mxu0 %v515
        %v584 = vpop.f32.mrf.mxu0
        %v585 = vadd.f32 0.0, %v584
        %586 = vdwg.mxu0
        %587 = vmatpush.msra.mxu0 0.0
        %588 = vmatpush.msra.mxu0 0.0
        %589 = vmatpush.msra.mxu0 0.0
        %590 = vmatpush.msra.mxu0 0.0
        %591 = vmatpush.msra.mxu0 0.0
        %592 = vmatpush.msra.mxu0 0.0
        %593 = vmatpush.msra.mxu0 0.0
        %594 = vmatpush.msra.mxu0 0.0
        %595 = vmatpush.msra.mxu0 0.0
        %596 = vmatpush.msra.mxu0 0.0
        %597 = vmatpush.msra.mxu0 0.0
        %598 = vmatpush.msra.mxu0 0.0
        %599 = vmatpush.msra.mxu0 0.0
        %600 = vmatpush.msra.mxu0 0.0
        %601 = vmatpush.msra.mxu0 0.0
        %602 = vmatpush.msra.mxu0 %v520
        %603 = vmatmul.f32.gmra.mxu0 %v470
        %v604 = vpop.f32.mrf.mxu0
        %v605 = vadd.f32 0.0, %v604
        %606 = vmatmul.f32.gmra.mxu0 %v473
        %v607 = vpop.f32.mrf.mxu0
        %v608 = vadd.f32 0.0, %v607
        %609 = vmatmul.f32.gmra.mxu0 %v476
        %v610 = vpop.f32.mrf.mxu0
        %v611 = vadd.f32 0.0, %v610
        %612 = vmatmul.f32.gmra.mxu0 %v479
        %v613 = vpop.f32.mrf.mxu0
        %v614 = vadd.f32 0.0, %v613
        %615 = vmatmul.f32.gmra.mxu0 %v482
        %v616 = vpop.f32.mrf.mxu0
        %v617 = vadd.f32 0.0, %v616
        %618 = vmatmul.f32.gmra.mxu0 %v485
        %v619 = vpop.f32.mrf.mxu0
        %v620 = vadd.f32 0.0, %v619
        %621 = vmatmul.f32.gmra.mxu0 %v488
        %v622 = vpop.f32.mrf.mxu0
        %v623 = vadd.f32 0.0, %v622
        %624 = vmatmul.f32.gmra.mxu0 %v491
        %v625 = vpop.f32.mrf.mxu0
        %v626 = vadd.f32 0.0, %v625
        %627 = vmatmul.f32.gmra.mxu0 %v494
        %v628 = vpop.f32.mrf.mxu0
        %v629 = vadd.f32 0.0, %v628
        %630 = vmatmul.f32.gmra.mxu0 %v497
        %v631 = vpop.f32.mrf.mxu0
        %v632 = vadd.f32 0.0, %v631
        %633 = vmatmul.f32.gmra.mxu0 %v500
        %v634 = vpop.f32.mrf.mxu0
        %v635 = vadd.f32 0.0, %v634
        %636 = vmatmul.f32.gmra.mxu0 %v503
        %v637 = vpop.f32.mrf.mxu0
        %v638 = vadd.f32 0.0, %v637
        %639 = vmatmul.f32.gmra.mxu0 %v506
        %v640 = vpop.f32.mrf.mxu0
        %v641 = vadd.f32 0.0, %v640
        %642 = vmatmul.f32.gmra.mxu0 %v509
        %v643 = vpop.f32.mrf.mxu0
        %v644 = vadd.f32 0.0, %v643
        %645 = vmatmul.f32.gmra.mxu0 %v512
        %v646 = vpop.f32.mrf.mxu0
        %v647 = vadd.f32 0.0, %v646
        %648 = vmatmul.f32.gmra.mxu0 %v515
        %v649 = vpop.f32.mrf.mxu0
        %v650 = vadd.f32 0.0, %v649
        %651 = vdwg.mxu0
        %v652 = vmax.f32 %v540, %v605
        %653 = vmax.xlane.f32.xlu0 %v652
        %v654 = vpop.xlane.xlu0 %653
        %v655 = vmax.f32 %v543, %v608
        %656 = vmax.xlane.f32.xlu0 %v655
        %v657 = vpop.xlane.xlu0 %656
        %v658 = vmax.f32 %v546, %v611
        %659 = vmax.xlane.f32.xlu0 %v658
        %v660 = vpop.xlane.xlu0 %659
        %v661 = vmax.f32 %v549, %v614
        %662 = vmax.xlane.f32.xlu0 %v661
        %v663 = vpop.xlane.xlu0 %662
        %v664 = vmax.f32 %v552, %v617
        %665 = vmax.xlane.f32.xlu0 %v664
        %v666 = vpop.xlane.xlu0 %665
        %v667 = vmax.f32 %v555, %v620
        %668 = vmax.xlane.f32.xlu0 %v667
        %v669 = vpop.xlane.xlu0 %668
        %v670 = vmax.f32 %v558, %v623
        %671 = vmax.xlane.f32.xlu0 %v670
        %v672 = vpop.xlane.xlu0 %671
        %v673 = vmax.f32 %v561, %v626
        %674 = vmax.xlane.f32.xlu0 %v673
        %v675 = vpop.xlane.xlu0 %674
        %v676 = vmax.f32 %v564, %v629
        %677 = vmax.xlane.f32.xlu0 %v676
        %v678 = vpop.xlane.xlu0 %677
        %v679 = vmax.f32 %v567, %v632
        %680 = vmax.xlane.f32.xlu0 %v679
        %v681 = vpop.xlane.xlu0 %680
        %v682 = vmax.f32 %v570, %v635
        %683 = vmax.xlane.f32.xlu0 %v682
        %v684 = vpop.xlane.xlu0 %683
        %v685 = vmax.f32 %v573, %v638
        %686 = vmax.xlane.f32.xlu0 %v685
        %v687 = vpop.xlane.xlu0 %686
        %v688 = vmax.f32 %v576, %v641
        %689 = vmax.xlane.f32.xlu0 %v688
        %v690 = vpop.xlane.xlu0 %689
        %v691 = vmax.f32 %v579, %v644
        %692 = vmax.xlane.f32.xlu0 %v691
        %v693 = vpop.xlane.xlu0 %692
        %v694 = vmax.f32 %v582, %v647
        %695 = vmax.xlane.f32.xlu0 %v694
        %v696 = vpop.xlane.xlu0 %695
        %v697 = vmax.f32 %v585, %v650
        %698 = vmax.xlane.f32.xlu0 %v697
        %v699 = vpop.xlane.xlu0 %698
        %v700 = vsub.f32 %v540, %v654
        %v701 = vsub.f32 %v605, %v654
        %v702 = vsub.f32 %v543, %v657
        %v703 = vsub.f32 %v608, %v657
        %v704 = vsub.f32 %v546, %v660
        %v705 = vsub.f32 %v611, %v660
        %v706 = vsub.f32 %v549, %v663
        %v707 = vsub.f32 %v614, %v663
        %v708 = vsub.f32 %v552, %v666
        %v709 = vsub.f32 %v617, %v666
        %v710 = vsub.f32 %v555, %v669
        %v711 = vsub.f32 %v620, %v669
        %v712 = vsub.f32 %v558, %v672
        %v713 = vsub.f32 %v623, %v672
        %v714 = vsub.f32 %v561, %v675
        %v715 = vsub.f32 %v626, %v675
        %v716 = vsub.f32 %v564, %v678
        %v717 = vsub.f32 %v629, %v678
        %v718 = vsub.f32 %v567, %v681
        %v719 = vsub.f32 %v632, %v681
        %v720 = vsub.f32 %v570, %v684
        %v721 = vsub.f32 %v635, %v684
        %v722 = vsub.f32 %v573, %v687
        %v723 = vsub.f32 %v638, %v687
        %v724 = vsub.f32 %v576, %v690
        %v725 = vsub.f32 %v641, %v690
        %v726 = vsub.f32 %v579, %v693
        %v727 = vsub.f32 %v644, %v693
        %v728 = vsub.f32 %v582, %v696
        %v729 = vsub.f32 %v647, %v696
        %v730 = vsub.f32 %v585, %v699
        %v731 = vsub.f32 %v650, %v699
        %v732 = vmul.f32 %v700, 1.442695
        %v733 = vpow.pop %v732
        %v734 = vmul.f32 %v701, 1.442695
        %v735 = vpow.pop %v734
        %v736 = vmul.f32 %v702, 1.442695
        %v737 = vpow.pop %v736
        %v738 = vmul.f32 %v703, 1.442695
        %v739 = vpow.pop %v738
        %v740 = vmul.f32 %v704, 1.442695
        %v741 = vpow.pop %v740
        %v742 = vmul.f32 %v705, 1.442695
        %v743 = vpow.pop %v742
        %v744 = vmul.f32 %v706, 1.442695
        %v745 = vpow.pop %v744
        %v746 = vmul.f32 %v707, 1.442695
        %v747 = vpow.pop %v746
        %v748 = vmul.f32 %v708, 1.442695
        %v749 = vpow.pop %v748
        %v750 = vmul.f32 %v709, 1.442695
        %v751 = vpow.pop %v750
        %v752 = vmul.f32 %v710, 1.442695
        %v753 = vpow.pop %v752
        %v754 = vmul.f32 %v711, 1.442695
        %v755 = vpow.pop %v754
        %v756 = vmul.f32 %v712, 1.442695
        %v757 = vpow.pop %v756
        %v758 = vmul.f32 %v713, 1.442695
        %v759 = vpow.pop %v758
        %v760 = vmul.f32 %v714, 1.442695
        %v761 = vpow.pop %v760
        %v762 = vmul.f32 %v715, 1.442695
        %v763 = vpow.pop %v762
        %v764 = vmul.f32 %v716, 1.442695
        %v765 = vpow.pop %v764
        %v766 = vmul.f32 %v717, 1.442695
        %v767 = vpow.pop %v766
        %v768 = vmul.f32 %v718, 1.442695
        %v769 = vpow.pop %v768
        %v770 = vmul.f32 %v719, 1.442695
        %v771 = vpow.pop %v770
        %v772 = vmul.f32 %v720, 1.442695
        %v773 = vpow.pop %v772
        %v774 = vmul.f32 %v721, 1.442695
        %v775 = vpow.pop %v774
        %v776 = vmul.f32 %v722, 1.442695
        %v777 = vpow.pop %v776
        %v778 = vmul.f32 %v723, 1.442695
        %v779 = vpow.pop %v778
        %v780 = vmul.f32 %v724, 1.442695
        %v781 = vpow.pop %v780
        %v782 = vmul.f32 %v725, 1.442695
        %v783 = vpow.pop %v782
        %v784 = vmul.f32 %v726, 1.442695
        %v785 = vpow.pop %v784
        %v786 = vmul.f32 %v727, 1.442695
        %v787 = vpow.pop %v786
        %v788 = vmul.f32 %v728, 1.442695
        %v789 = vpow.pop %v788
        %v790 = vmul.f32 %v729, 1.442695
        %v791 = vpow.pop %v790
        %v792 = vmul.f32 %v730, 1.442695
        %v793 = vpow.pop %v792
        %v794 = vmul.f32 %v731, 1.442695
        %v795 = vpow.pop %v794
        %v796 = vadd.f32 %v733, %v735
        %797 = vadd.xlane.f32.xlu0 %v796
        %v798 = vpop.xlane.xlu0 %797
        %v799 = vadd.f32 %v737, %v739
        %800 = vadd.xlane.f32.xlu0 %v799
        %v801 = vpop.xlane.xlu0 %800
        %v802 = vadd.f32 %v741, %v743
        %803 = vadd.xlane.f32.xlu0 %v802
        %v804 = vpop.xlane.xlu0 %803
        %v805 = vadd.f32 %v745, %v747
        %806 = vadd.xlane.f32.xlu0 %v805
        %v807 = vpop.xlane.xlu0 %806
        %v808 = vadd.f32 %v749, %v751
        %809 = vadd.xlane.f32.xlu0 %v808
        %v810 = vpop.xlane.xlu0 %809
        %v811 = vadd.f32 %v753, %v755
        %812 = vadd.xlane.f32.xlu0 %v811
        %v813 = vpop.xlane.xlu0 %812
        %v814 = vadd.f32 %v757, %v759
        %815 = vadd.xlane.f32.xlu0 %v814
        %v816 = vpop.xlane.xlu0 %815
        %v817 = vadd.f32 %v761, %v763
        %818 = vadd.xlane.f32.xlu0 %v817
        %v819 = vpop.xlane.xlu0 %818
        %v820 = vadd.f32 %v765, %v767
        %821 = vadd.xlane.f32.xlu0 %v820
        %v822 = vpop.xlane.xlu0 %821
        %v823 = vadd.f32 %v769, %v771
        %824 = vadd.xlane.f32.xlu0 %v823
        %v825 = vpop.xlane.xlu0 %824
        %v826 = vadd.f32 %v773, %v775
        %827 = vadd.xlane.f32.xlu0 %v826
        %v828 = vpop.xlane.xlu0 %827
        %v829 = vadd.f32 %v777, %v779
        %830 = vadd.xlane.f32.xlu0 %v829
        %v831 = vpop.xlane.xlu0 %830
        %v832 = vadd.f32 %v781, %v783
        %833 = vadd.xlane.f32.xlu0 %v832
        %v834 = vpop.xlane.xlu0 %833
        %v835 = vadd.f32 %v785, %v787
        %836 = vadd.xlane.f32.xlu0 %v835
        %v837 = vpop.xlane.xlu0 %836
        %v838 = vadd.f32 %v789, %v791
        %839 = vadd.xlane.f32.xlu0 %v838
        %v840 = vpop.xlane.xlu0 %839
        %v841 = vadd.f32 %v793, %v795
        %842 = vadd.xlane.f32.xlu0 %v841
        %v843 = vpop.xlane.xlu0 %842
        %v844 = vrcp.pop %v798
        %v845 = vmul.f32 %v798, %v844
        %v846 = vsub.f32 1.0, %v845
        %v847 = vmul.f32 %v844, %v846
        %v848 = vadd.f32 %v844, %v847
        %vm849 = vweird.f32 %v798
        %vm850 = vweird.f32 %v844
        %vm851 = vmor %vm849, %vm850
        %v852 = vsel %vm851, %v844, %v848
        %v853 = vand.u32 2147483647, %v798
        %vm854 = vcmp.eq.f32.partialorder %v853, 8.507059e+37
        %v855 = vand.u32 %v798, 2147483648
        %v856 = vor.u32 1.1754944e-38, %v855
        %v857 = vsel %vm854, %v856, %v852
        %v858 = vrcp.pop %v801
        %v859 = vmul.f32 %v801, %v858
        %v860 = vsub.f32 1.0, %v859
        %v861 = vmul.f32 %v858, %v860
        %v862 = vadd.f32 %v858, %v861
        %vm863 = vweird.f32 %v801
        %vm864 = vweird.f32 %v858
        %vm865 = vmor %vm863, %vm864
        %v866 = vsel %vm865, %v858, %v862
        %v867 = vand.u32 2147483647, %v801
        %vm868 = vcmp.eq.f32.partialorder %v867, 8.507059e+37
        %v869 = vand.u32 %v801, 2147483648
        %v870 = vor.u32 1.1754944e-38, %v869
        %v871 = vsel %vm868, %v870, %v866
        %v872 = vrcp.pop %v804
        %v873 = vmul.f32 %v804, %v872
        %v874 = vsub.f32 1.0, %v873
        %v875 = vmul.f32 %v872, %v874
        %v876 = vadd.f32 %v872, %v875
        %vm877 = vweird.f32 %v804
        %vm878 = vweird.f32 %v872
        %vm879 = vmor %vm877, %vm878
        %v880 = vsel %vm879, %v872, %v876
        %v881 = vand.u32 2147483647, %v804
        %vm882 = vcmp.eq.f32.partialorder %v881, 8.507059e+37
        %v883 = vand.u32 %v804, 2147483648
        %v884 = vor.u32 1.1754944e-38, %v883
        %v885 = vsel %vm882, %v884, %v880
        %v886 = vrcp.pop %v807
        %v887 = vmul.f32 %v807, %v886
        %v888 = vsub.f32 1.0, %v887
        %v889 = vmul.f32 %v886, %v888
        %v890 = vadd.f32 %v886, %v889
        %vm891 = vweird.f32 %v807
        %vm892 = vweird.f32 %v886
        %vm893 = vmor %vm891, %vm892
        %v894 = vsel %vm893, %v886, %v890
        %v895 = vand.u32 2147483647, %v807
        %vm896 = vcmp.eq.f32.partialorder %v895, 8.507059e+37
        %v897 = vand.u32 %v807, 2147483648
        %v898 = vor.u32 1.1754944e-38, %v897
        %v899 = vsel %vm896, %v898, %v894
        %v900 = vrcp.pop %v810
        %v901 = vmul.f32 %v810, %v900
        %v902 = vsub.f32 1.0, %v901
        %v903 = vmul.f32 %v900, %v902
        %v904 = vadd.f32 %v900, %v903
        %vm905 = vweird.f32 %v810
        %vm906 = vweird.f32 %v900
        %vm907 = vmor %vm905, %vm906
        %v908 = vsel %vm907, %v900, %v904
        %v909 = vand.u32 2147483647, %v810
        %vm910 = vcmp.eq.f32.partialorder %v909, 8.507059e+37
        %v911 = vand.u32 %v810, 2147483648
        %v912 = vor.u32 1.1754944e-38, %v911
        %v913 = vsel %vm910, %v912, %v908
        %v914 = vrcp.pop %v813
        %v915 = vmul.f32 %v813, %v914
        %v916 = vsub.f32 1.0, %v915
        %v917 = vmul.f32 %v914, %v916
        %v918 = vadd.f32 %v914, %v917
        %vm919 = vweird.f32 %v813
        %vm920 = vweird.f32 %v914
        %vm921 = vmor %vm919, %vm920
        %v922 = vsel %vm921, %v914, %v918
        %v923 = vand.u32 2147483647, %v813
        %vm924 = vcmp.eq.f32.partialorder %v923, 8.507059e+37
        %v925 = vand.u32 %v813, 2147483648
        %v926 = vor.u32 1.1754944e-38, %v925
        %v927 = vsel %vm924, %v926, %v922
        %v928 = vrcp.pop %v816
        %v929 = vmul.f32 %v816, %v928
        %v930 = vsub.f32 1.0, %v929
        %v931 = vmul.f32 %v928, %v930
        %v932 = vadd.f32 %v928, %v931
        %vm933 = vweird.f32 %v816
        %vm934 = vweird.f32 %v928
        %vm935 = vmor %vm933, %vm934
        %v936 = vsel %vm935, %v928, %v932
        %v937 = vand.u32 2147483647, %v816
        %vm938 = vcmp.eq.f32.partialorder %v937, 8.507059e+37
        %v939 = vand.u32 %v816, 2147483648
        %v940 = vor.u32 1.1754944e-38, %v939
        %v941 = vsel %vm938, %v940, %v936
        %v942 = vrcp.pop %v819
        %v943 = vmul.f32 %v819, %v942
        %v944 = vsub.f32 1.0, %v943
        %v945 = vmul.f32 %v942, %v944
        %v946 = vadd.f32 %v942, %v945
        %vm947 = vweird.f32 %v819
        %vm948 = vweird.f32 %v942
        %vm949 = vmor %vm947, %vm948
        %v950 = vsel %vm949, %v942, %v946
        %v951 = vand.u32 2147483647, %v819
        %vm952 = vcmp.eq.f32.partialorder %v951, 8.507059e+37
        %v953 = vand.u32 %v819, 2147483648
        %v954 = vor.u32 1.1754944e-38, %v953
        %v955 = vsel %vm952, %v954, %v950
        %v956 = vrcp.pop %v822
        %v957 = vmul.f32 %v822, %v956
        %v958 = vsub.f32 1.0, %v957
        %v959 = vmul.f32 %v956, %v958
        %v960 = vadd.f32 %v956, %v959
        %vm961 = vweird.f32 %v822
        %vm962 = vweird.f32 %v956
        %vm963 = vmor %vm961, %vm962
        %v964 = vsel %vm963, %v956, %v960
        %v965 = vand.u32 2147483647, %v822
        %vm966 = vcmp.eq.f32.partialorder %v965, 8.507059e+37
        %v967 = vand.u32 %v822, 2147483648
        %v968 = vor.u32 1.1754944e-38, %v967
        %v969 = vsel %vm966, %v968, %v964
        %v970 = vrcp.pop %v825
        %v971 = vmul.f32 %v825, %v970
        %v972 = vsub.f32 1.0, %v971
        %v973 = vmul.f32 %v970, %v972
        %v974 = vadd.f32 %v970, %v973
        %vm975 = vweird.f32 %v825
        %vm976 = vweird.f32 %v970
        %vm977 = vmor %vm975, %vm976
        %v978 = vsel %vm977, %v970, %v974
        %v979 = vand.u32 2147483647, %v825
        %vm980 = vcmp.eq.f32.partialorder %v979, 8.507059e+37
        %v981 = vand.u32 %v825, 2147483648
        %v982 = vor.u32 1.1754944e-38, %v981
        %v983 = vsel %vm980, %v982, %v978
        %v984 = vrcp.pop %v828
        %v985 = vmul.f32 %v828, %v984
        %v986 = vsub.f32 1.0, %v985
        %v987 = vmul.f32 %v984, %v986
        %v988 = vadd.f32 %v984, %v987
        %vm989 = vweird.f32 %v828
        %vm990 = vweird.f32 %v984
        %vm991 = vmor %vm989, %vm990
        %v992 = vsel %vm991, %v984, %v988
        %v993 = vand.u32 2147483647, %v828
        %vm994 = vcmp.eq.f32.partialorder %v993, 8.507059e+37
        %v995 = vand.u32 %v828, 2147483648
        %v996 = vor.u32 1.1754944e-38, %v995
        %v997 = vsel %vm994, %v996, %v992
        %v998 = vrcp.pop %v831
        %v999 = vmul.f32 %v831, %v998
        %v1000 = vsub.f32 1.0, %v999
        %v1001 = vmul.f32 %v998, %v1000
        %v1002 = vadd.f32 %v998, %v1001
        %vm1003 = vweird.f32 %v831
        %vm1004 = vweird.f32 %v998
        %vm1005 = vmor %vm1003, %vm1004
        %v1006 = vsel %vm1005, %v998, %v1002
        %v1007 = vand.u32 2147483647, %v831
        %vm1008 = vcmp.eq.f32.partialorder %v1007, 8.507059e+37
        %v1009 = vand.u32 %v831, 2147483648
        %v1010 = vor.u32 1.1754944e-38, %v1009
        %v1011 = vsel %vm1008, %v1010, %v1006
        %v1012 = vrcp.pop %v834
        %v1013 = vmul.f32 %v834, %v1012
        %v1014 = vsub.f32 1.0, %v1013
        %v1015 = vmul.f32 %v1012, %v1014
        %v1016 = vadd.f32 %v1012, %v1015
        %vm1017 = vweird.f32 %v834
        %vm1018 = vweird.f32 %v1012
        %vm1019 = vmor %vm1017, %vm1018
        %v1020 = vsel %vm1019, %v1012, %v1016
        %v1021 = vand.u32 2147483647, %v834
        %vm1022 = vcmp.eq.f32.partialorder %v1021, 8.507059e+37
        %v1023 = vand.u32 %v834, 2147483648
        %v1024 = vor.u32 1.1754944e-38, %v1023
        %v1025 = vsel %vm1022, %v1024, %v1020
        %v1026 = vrcp.pop %v837
        %v1027 = vmul.f32 %v837, %v1026
        %v1028 = vsub.f32 1.0, %v1027
        %v1029 = vmul.f32 %v1026, %v1028
        %v1030 = vadd.f32 %v1026, %v1029
        %vm1031 = vweird.f32 %v837
        %vm1032 = vweird.f32 %v1026
        %vm1033 = vmor %vm1031, %vm1032
        %v1034 = vsel %vm1033, %v1026, %v1030
        %v1035 = vand.u32 2147483647, %v837
        %vm1036 = vcmp.eq.f32.partialorder %v1035, 8.507059e+37
        %v1037 = vand.u32 %v837, 2147483648
        %v1038 = vor.u32 1.1754944e-38, %v1037
        %v1039 = vsel %vm1036, %v1038, %v1034
        %v1040 = vrcp.pop %v840
        %v1041 = vmul.f32 %v840, %v1040
        %v1042 = vsub.f32 1.0, %v1041
        %v1043 = vmul.f32 %v1040, %v1042
        %v1044 = vadd.f32 %v1040, %v1043
        %vm1045 = vweird.f32 %v840
        %vm1046 = vweird.f32 %v1040
        %vm1047 = vmor %vm1045, %vm1046
        %v1048 = vsel %vm1047, %v1040, %v1044
        %v1049 = vand.u32 2147483647, %v840
        %vm1050 = vcmp.eq.f32.partialorder %v1049, 8.507059e+37
        %v1051 = vand.u32 %v840, 2147483648
        %v1052 = vor.u32 1.1754944e-38, %v1051
        %v1053 = vsel %vm1050, %v1052, %v1048
        %v1054 = vrcp.pop %v843
        %v1055 = vmul.f32 %v843, %v1054
        %v1056 = vsub.f32 1.0, %v1055
        %v1057 = vmul.f32 %v1054, %v1056
        %v1058 = vadd.f32 %v1054, %v1057
        %vm1059 = vweird.f32 %v843
        %vm1060 = vweird.f32 %v1054
        %vm1061 = vmor %vm1059, %vm1060
        %v1062 = vsel %vm1061, %v1054, %v1058
        %v1063 = vand.u32 2147483647, %v843
        %vm1064 = vcmp.eq.f32.partialorder %v1063, 8.507059e+37
        %v1065 = vand.u32 %v843, 2147483648
        %v1066 = vor.u32 1.1754944e-38, %v1065
        %v1067 = vsel %vm1064, %v1066, %v1062
        %v1068 = vmul.f32 %v733, %v857
        %v1069 = vmul.f32 %v735, %v857
        %v1070 = vmul.f32 %v737, %v871
        %v1071 = vmul.f32 %v739, %v871
        %v1072 = vmul.f32 %v741, %v885
        %v1073 = vmul.f32 %v743, %v885
        %v1074 = vmul.f32 %v745, %v899
        %v1075 = vmul.f32 %v747, %v899
        %v1076 = vmul.f32 %v749, %v913
        %v1077 = vmul.f32 %v751, %v913
        %v1078 = vmul.f32 %v753, %v927
        %v1079 = vmul.f32 %v755, %v927
        %v1080 = vmul.f32 %v757, %v941
        %v1081 = vmul.f32 %v759, %v941
        %v1082 = vmul.f32 %v761, %v955
        %v1083 = vmul.f32 %v763, %v955
        %v1084 = vmul.f32 %v765, %v969
        %v1085 = vmul.f32 %v767, %v969
        %v1086 = vmul.f32 %v769, %v983
        %v1087 = vmul.f32 %v771, %v983
        %v1088 = vmul.f32 %v773, %v997
        %v1089 = vmul.f32 %v775, %v997
        %v1090 = vmul.f32 %v777, %v1011
        %v1091 = vmul.f32 %v779, %v1011
        %v1092 = vmul.f32 %v781, %v1025
        %v1093 = vmul.f32 %v783, %v1025
        %v1094 = vmul.f32 %v785, %v1039
        %v1095 = vmul.f32 %v787, %v1039
        %v1096 = vmul.f32 %v789, %v1053
        %v1097 = vmul.f32 %v791, %v1053
        %v1098 = vmul.f32 %v793, %v1067
        %v1099 = vmul.f32 %v795, %v1067
        %1100 = vmatpush.xpose.msra.mxu0 %v1098
        %1101 = vmatpush.xpose.msra.mxu0 %v1096
        %1102 = vmatpush.xpose.msra.mxu0 %v1094
        %1103 = vmatpush.xpose.msra.mxu0 %v1092
        %1104 = vmatpush.xpose.msra.mxu0 %v1090
        %1105 = vmatpush.xpose.msra.mxu0 %v1088
        %1106 = vmatpush.xpose.msra.mxu0 %v1086
        %1107 = vmatpush.xpose.msra.mxu0 %v1084
        %1108 = vmatpush.xpose.msra.mxu0 %v1082
        %1109 = vmatpush.xpose.msra.mxu0 %v1080
        %1110 = vmatpush.xpose.msra.mxu0 %v1078
        %1111 = vmatpush.xpose.msra.mxu0 %v1076
        %1112 = vmatpush.xpose.msra.mxu0 %v1074
        %1113 = vmatpush.xpose.msra.mxu0 %v1072
        %1114 = vmatpush.xpose.msra.mxu0 %v1070
        %1115 = vmatpush.xpose.msra.mxu0 %v1068
        %1116 = vmatmul.f32.gmra.mxu0 %v428
        %v1117 = vpop.f32.mrf.mxu0
        %v1118 = vadd.f32 0.0, %v1117
        %1119 = vmatmul.f32.gmra.mxu0 %v430
        %v1120 = vpop.f32.mrf.mxu0
        %v1121 = vadd.f32 0.0, %v1120
        %1122 = vdwg.mxu0
        %1123 = vmatpush.xpose.msra.mxu0 %v1099
        %1124 = vmatpush.xpose.msra.mxu0 %v1097
        %1125 = vmatpush.xpose.msra.mxu0 %v1095
        %1126 = vmatpush.xpose.msra.mxu0 %v1093
        %1127 = vmatpush.xpose.msra.mxu0 %v1091
        %1128 = vmatpush.xpose.msra.mxu0 %v1089
        %1129 = vmatpush.xpose.msra.mxu0 %v1087
        %1130 = vmatpush.xpose.msra.mxu0 %v1085
        %1131 = vmatpush.xpose.msra.mxu0 %v1083
        %1132 = vmatpush.xpose.msra.mxu0 %v1081
        %1133 = vmatpush.xpose.msra.mxu0 %v1079
        %1134 = vmatpush.xpose.msra.mxu0 %v1077
        %1135 = vmatpush.xpose.msra.mxu0 %v1075
        %1136 = vmatpush.xpose.msra.mxu0 %v1073
        %1137 = vmatpush.xpose.msra.mxu0 %v1071
        %1138 = vmatpush.xpose.msra.mxu0 %v1069
        %1139 = vmatmul.f32.gmra.mxu0 %v429
        %v1140 = vpop.f32.mrf.mxu0
        %v1141 = vadd.f32 %v1118, %v1140
        %1142 = vmatmul.f32.gmra.mxu0 %v431
        %v1143 = vpop.f32.mrf.mxu0
        %v1144 = vadd.f32 %v1121, %v1143
        %1145 = vdwg.mxu0
        %s1146 = sld [smem:[#allocation2]]
        %v1147 = vstv %s1146
        %v1148 = vmul.f32 %v1147, %v1141
        %v1149 = vmul.f32 %v1147, %v1144
        %v1150 = vld [vmem:[%s345] sm:$0xff]
        %v1151 = vld [vmem:[%s345 + $0x8] sm:$0xff]
        %v1152 = vadd.f32 %v1148, %v1150
        %v1153 = vadd.f32 %v1149, %v1151
        %1154 = vst [vmem:[%s417] sm:$0xff] %v1152
        %1155 = vst [vmem:[%s417 + $0x8] sm:$0xff] %v1153
        %1156 = vst [vmem:[%s424] sm:$0xff] %v1068
        %1157 = vst [vmem:[%s424 + $0x8] sm:$0xff] %v1069
        %1158 = vst [vmem:[%s424 + $0x10] sm:$0xff] %v1070
        %1159 = vst [vmem:[%s424 + $0x18] sm:$0xff] %v1071
        %1160 = vst [vmem:[%s424 + $0x20] sm:$0xff] %v1072
        %1161 = vst [vmem:[%s424 + $0x28] sm:$0xff] %v1073
        %1162 = vst [vmem:[%s424 + $0x30] sm:$0xff] %v1074
        %1163 = vst [vmem:[%s424 + $0x38] sm:$0xff] %v1075
        %1164 = vst [vmem:[%s424 + $0x40] sm:$0xff] %v1076
        %1165 = vst [vmem:[%s424 + $0x48] sm:$0xff] %v1077
        %1166 = vst [vmem:[%s424 + $0x50] sm:$0xff] %v1078
        %1167 = vst [vmem:[%s424 + $0x58] sm:$0xff] %v1079
        %1168 = vst [vmem:[%s424 + $0x60] sm:$0xff] %v1080
        %1169 = vst [vmem:[%s424 + $0x68] sm:$0xff] %v1081
        %1170 = vst [vmem:[%s424 + $0x70] sm:$0xff] %v1082
        %1171 = vst [vmem:[%s424 + $0x78] sm:$0xff] %v1083
        %1172 = vst [vmem:[%s424 + $0x80] sm:$0xff] %v1084
        %1173 = vst [vmem:[%s424 + $0x88] sm:$0xff] %v1085
        %1174 = vst [vmem:[%s424 + $0x90] sm:$0xff] %v1086
        %1175 = vst [vmem:[%s424 + $0x98] sm:$0xff] %v1087
        %1176 = vst [vmem:[%s424 + $0xa0] sm:$0xff] %v1088
        %1177 = vst [vmem:[%s424 + $0xa8] sm:$0xff] %v1089
        %1178 = vst [vmem:[%s424 + $0xb0] sm:$0xff] %v1090
        %1179 = vst [vmem:[%s424 + $0xb8] sm:$0xff] %v1091
        %1180 = vst [vmem:[%s424 + $0xc0] sm:$0xff] %v1092
        %1181 = vst [vmem:[%s424 + $0xc8] sm:$0xff] %v1093
        %1182 = vst [vmem:[%s424 + $0xd0] sm:$0xff] %v1094
        %1183 = vst [vmem:[%s424 + $0xd8] sm:$0xff] %v1095
        %1184 = vst [vmem:[%s424 + $0xe0] sm:$0xff] %v1096
        %1185 = vst [vmem:[%s424 + $0xe8] sm:$0xff] %v1097
        %1186 = vst [vmem:[%s424 + $0xf0] sm:$0xff] %v1098
        %1187 = vst [vmem:[%s424 + $0xf8] sm:$0xff] %v1099
        %s1188 = sand.u32 %s185, 1
        %s1189 = scalar_lea.sflag [#allocation5], %s1188
        %s1190 = sand.u32 %s185, 1
        %s1191 = smul.addr %s1190, 16
        %s1192 = scalar_lea.vmem [#allocation11], %s1191
        %s1193 = sand.u32 %s213, 1
        %s1194 = scalar_lea.sflag [#allocation13], %s1193
        %s1195 = sand.u32 %s213, 1
        %s1196 = smul.addr %s1195, 256
        %s1197 = scalar_lea.vmem [#allocation12], %s1196
        // Predicated region
        $region57: #{tpu_custom_call.1} parent=39 // pred_check
          %p1198 = pneg %p195
        $region58: #{tpu_custom_call.1} parent=39 // pred_check_branch
          %1200 = sbr.rel (%p1198) target = $region60
        $region59: #{tpu_custom_call.1} parent=39 // pred_region
          %1202 = vsyncadd %s1189, 0
          %s1203 = smul.addr %s38, 4
          %s1204 = sadd.s32 %s39, %s1203
          %s1205 = smul.addr %s1204, 8
          %s1206 = scalar_lea.hbm %s5, %s1205
          %s1207 = sshll.u32 %s1192, 4
          %s1208 = int_to_ptr.vmem [resolvable:$true] %s1207
          %s1209 = sshll.u32 %s1206, 4
          %s1210 = int_to_ptr.hbm [resolvable:$true] %s1209
          %1215 = dma.vmem_to_hbm [thread:$0]  %s1208, 256, %s1210, %s1189, 128, 256, 8
        $region60: #{tpu_custom_call.1} parent=39 // pred_fallthru
          _
        // Predicated region
        $region61: #{tpu_custom_call.1} parent=39 // pred_check
          %p1216 = pneg %p223
        $region62: #{tpu_custom_call.1} parent=39 // pred_check_branch
          %1218 = sbr.rel (%p1216) target = $region64
        $region63: #{tpu_custom_call.1} parent=39 // pred_region
          %s1219 = smul.u32 16, %s39
          %1221 = vsyncadd %s1194, 0
          %s1222 = smul.addr %s1219, 2
          %s1223 = smul.addr %s38, 64
          %s1224 = sadd.s32 %s1222, %s1223
          %s1225 = smul.addr %s1224, 8
          %s1226 = scalar_lea.hbm %s6, %s1225
          %s1227 = sshll.u32 %s1197, 4
          %s1228 = int_to_ptr.vmem [resolvable:$true] %s1227
          %s1229 = sshll.u32 %s1226, 4
          %s1230 = int_to_ptr.hbm [resolvable:$true] %s1229
          %1235 = dma.vmem_to_hbm [thread:$0]  %s1228, 4096, %s1230, %s1194, 256, 256, 16
        $region64: #{tpu_custom_call.1} parent=39 // pred_fallthru
          _
      $region40: #{tpu_custom_call.1} parent=5 // pred_fallthru
        _
      %p1236 = scmp.le.s32.totalorder 2, %s29
      // Predicated region
      $region65: #{tpu_custom_call.1} parent=5 // pred_check
        %p1237 = pneg %p1236
      $region66: #{tpu_custom_call.1} parent=5 // pred_check_branch
        %1239 = sbr.rel (%p1237) target = $region68
      $region67: #{tpu_custom_call.1} parent=5 // pred_region
        %s1240 = ssub.s32 %s29, 2
        // Predicated region
        $region69: #{tpu_custom_call.1} parent=67 // pred_check
          %p1241 = pneg %p201
        $region70: #{tpu_custom_call.1} parent=67 // pred_check_branch
          %1243 = sbr.rel (%p1241) target = $region72
        $region71: #{tpu_custom_call.1} parent=67 // pred_region
          %s1244 = sand.u32 %s186, 1
          %s1245 = scalar_lea.sflag [#allocation5], %s1244
          %s1246 = sand.u32 %s186, 1
          %s1247 = smul.addr %s1246, 16
          %s1248 = scalar_lea.vmem [#allocation11], %s1247
          %1250 = dma.done %s1245, 256
        $region72: #{tpu_custom_call.1} parent=67 // pred_fallthru
          _
        // Predicated region
        $region73: #{tpu_custom_call.1} parent=67 // pred_check
          %p1251 = pneg %p229
        $region74: #{tpu_custom_call.1} parent=67 // pred_check_branch
          %1253 = sbr.rel (%p1251) target = $region76
        $region75: #{tpu_custom_call.1} parent=67 // pred_region
          %s1254 = sand.u32 %s214, 1
          %s1255 = scalar_lea.sflag [#allocation13], %s1254
          %s1256 = sand.u32 %s214, 1
          %s1257 = smul.addr %s1256, 256
          %s1258 = scalar_lea.vmem [#allocation12], %s1257
          %1260 = dma.done %s1255, 4096
        $region76: #{tpu_custom_call.1} parent=67 // pred_fallthru
          _
      $region68: #{tpu_custom_call.1} parent=5 // pred_fallthru
        _
    $region6: #{tpu_custom_call.1} parent=1 // loop_footer
      %s33 = sadd.s32 1, %s29
    $region7: #{tpu_custom_call.1} parent=1 // loop_footer_branch
      %28 = sbr.rel target = $region3
    $region8: #{tpu_custom_call.1} parent=1 // loop_exit
      _
    %1261 = vsyncpa [#allocation4], 1
    %s1262 = scalar_lea.sflag [#allocation4], 1
    %1263 = vsyncpa %s1262, 1
    %1264 = vsyncpa [#allocation7], 1
    %s1265 = scalar_lea.sflag [#allocation7], 1
    %1266 = vsyncpa %s1265, 1
    %1267 = vsyncpa [#allocation10], 1
    %s1268 = scalar_lea.sflag [#allocation10], 1
    %1269 = vsyncpa %s1268, 1
    %1270 = vsyncpa [#allocation5], 1
    %s1271 = scalar_lea.sflag [#allocation5], 1
    %1272 = vsyncpa %s1271, 1
    %1273 = vsyncpa [#allocation13], 1
    %s1274 = scalar_lea.sflag [#allocation13], 1
    %1275 = vsyncpa %s1274, 1

</llo_original>
